<compile_context>
chip_gen: v7x
topology: tpu7x:2x2x1
jax: 0.10.0
libtpu: 0.0.40
codegen_flags: <defaults>
</compile_context>

<pallas_src>
import jax
import jax.numpy as jnp
from jax import lax
from jax.experimental import pallas as pl
from jax.experimental.pallas import tpu as pltpu


def _cdiv(a, b):
    return -(-a // b)


def stgdl_kernel(x_ref, w1t_ref, b1_ref, w2t_ref, b2_ref, o_ref, h_ref):
    """One grid step: `bb` batch rows x `tile` spatial lanes.

    x_ref : (bb, C_in, tile)    f32   channels on sublanes, space on lanes
    w1t   : (C_hid_tot, C_in)   bf16  stacked component encoders (W1_k^T)
    b1    : (C_hid_tot, 1)      f32
    w2t   : (c_out, C_hid_tot)  bf16  (W2*std)^T tiled n_comp times (comp. sum)
    b2    : (c_out, 1)          f32   n_comp*b2*std + mean (Scaler folded)
    o_ref : (bb, c_out, tile)   f32
    h_ref : (C_hid_tot, chunk)  bf16  VMEM scratch bounding the h temp
    """
    bb = x_ref.shape[0]
    tile = x_ref.shape[-1]
    chunk = h_ref.shape[-1]
    n_full = tile // chunk
    rem = tile - n_full * chunk

    # Resident operands, hoisted out of both loops (JAX does not CSE
    # broadcast_in_dim, so broadcast the biases exactly once).
    w1t = w1t_ref[...]
    w2t = w2t_ref[...]
    b1 = jnp.broadcast_to(b1_ref[...], (w1t.shape[0], chunk))
    b2 = jnp.broadcast_to(b2_ref[...], (w2t.shape[0], chunk))

    def one_chunk(b, start, width, b1w, b2w):
        # bf16 on load -> native MXU dtype on all generations; f32 accumulation.
        xc = x_ref[b, :, pl.ds(start, width)].astype(jnp.bfloat16)
        h = jnp.dot(w1t, xc, preferred_element_type=jnp.float32) + b1w
        # bias + ReLU epilogue kept in f32 (no bf16 VPU on v5e); cast for MXU #2.
        h_ref[:, :width] = jnp.maximum(h, 0.0).astype(jnp.bfloat16)
        y = jnp.dot(w2t, h_ref[:, :width], preferred_element_type=jnp.float32) + b2w
        o_ref[b, :, pl.ds(start, width)] = y.astype(o_ref.dtype)

    def batch_body(b, carry):
        def chunk_body(c, inner):
            start = pl.multiple_of(c * chunk, chunk)
            one_chunk(b, start, chunk, b1, b2)
            return inner

        lax.fori_loop(0, n_full, chunk_body, 0)
        if rem:  # static tail (tile % chunk) — traced once, static sizes
            one_chunk(b, n_full * chunk, rem, b1[:, :rem], b2[:, :rem])
        return carry

    lax.fori_loop(0, bb, batch_body, 0)


def stgdl_forward(x, w1, b1, w2, b2, scale, mean, *,
                  target_lanes=65536, chunk_lanes=1024, min_grid_steps=4):
    """x: (B, C_in, N, T) NCHW (PyTorch conv layout). Returns (B, c_out, N, T) f32."""
    B, C_in, N, T = x.shape
    n_comp, _, c_hid = w1.shape
    c_out = w2.shape[1]
    NT = N * T
    C_hid_tot = n_comp * c_hid

    # guards against degenerate user tile sizes (< 128 -> div-by-zero in v1)
    target_lanes = max(128, int(target_lanes))
    chunk_lanes = max(128, (int(chunk_lanes) // 128) * 128)

    # ---- fold component sum + Scaler into the weights (tiny wrapper arrays) --
    std = scale.reshape(()).astype(jnp.float32)
    mu = mean.reshape(()).astype(jnp.float32)
    w1t = jnp.transpose(w1, (0, 2, 1)).reshape(C_hid_tot, C_in)       # stacked W1_k^T
    b1c = b1.reshape(C_hid_tot, 1).astype(jnp.float32)                # stacked b1_k
    w2t = jnp.tile((w2.astype(jnp.float32) * std).T, (1, n_comp))     # (c_out, C_hid_tot)
    b2c = (n_comp * b2.reshape(c_out).astype(jnp.float32) * std + mu).reshape(c_out, 1)
    w1t = w1t.astype(jnp.bfloat16)                                    # MXU-native dtype
    w2t = w2t.astype(jnp.bfloat16)

    # channels-first flatten: pure reshape, no transpose / extra HBM pass
    x3 = x.reshape(B, C_in, NT)

    # ---- tiling (no jnp.pad, no post-slice; boundary blocks are masked) ------
    if NT <= target_lanes:
        # Typical STGDL case: whole spatial extent fits one lane block.
        # Amortize the per-step fixed cost by blocking several batch rows.
        tile = NT                  # full extent -> always a legal block dim
        n_lane = 1
        bb = max(1, min(B, target_lanes // max(NT, 1)))
        # keep a few grid steps alive (v7x: 2 TCs + pipelining) as long as a
        # step still carries >= ~8K lanes of work
        while bb > 1 and _cdiv(B, bb) < min_grid_steps and (bb // 2) * NT >= 8192:
            bb //= 2
        chunk = min(chunk_lanes, tile)
    else:
        # Large spatial extent: lane-tile; the last (partial) block is handled
        # by Pallas boundary masking — no cross-lane mixing, so garbage padded
        # lanes never contaminate valid outputs.
        bb = 1
        chunk = min(chunk_lanes, target_lanes)
        tile = max(chunk, (target_lanes // chunk) * chunk)   # multiple of chunk & 128
        n_lane = _cdiv(NT, tile)

    grid = (_cdiv(B, bb), n_lane)

    cost = pl.CostEstimate(
        flops=2 * B * NT * C_hid_tot * (C_in + c_out),
        transcendentals=0,
        bytes_accessed=B * NT * (C_in + c_out) * 4
        + C_hid_tot * (C_in + c_out) * 2
        + (C_hid_tot + c_out) * 4,
    )

    out3 = pl.pallas_call(
        stgdl_kernel,
        out_shape=jax.ShapeDtypeStruct((B, c_out, NT), jnp.float32),
        grid=grid,
        in_specs=[
            pl.BlockSpec((bb, C_in, tile), lambda bi, ti: (bi, 0, ti)),   # x
            pl.BlockSpec((C_hid_tot, C_in), lambda bi, ti: (0, 0)),       # W1^T stacked (bf16)
            pl.BlockSpec((C_hid_tot, 1), lambda bi, ti: (0, 0)),          # b1 stacked (f32)
            pl.BlockSpec((c_out, C_hid_tot), lambda bi, ti: (0, 0)),      # (W2*std)^T tiled (bf16)
            pl.BlockSpec((c_out, 1), lambda bi, ti: (0, 0)),              # folded bias (f32)
        ],
        out_specs=pl.BlockSpec((bb, c_out, tile), lambda bi, ti: (bi, 0, ti)),
        scratch_shapes=[pltpu.VMEM((C_hid_tot, chunk), jnp.bfloat16)],
        compiler_params=pltpu.CompilerParams(
            dimension_semantics=("parallel", "parallel"),
            vmem_limit_bytes=32 * 1024 * 1024),
        cost_estimate=cost,
    )(x3, w1t, b1c, w2t, b2c)

    # free reshape back to NCHW (no transpose needed in this layout)
    return out3.reshape(B, c_out, N, T)


def stgdl_reference(x, w1, b1, w2, b2, scale, mean):
    """Pure-JAX reference: original per-component formulation, all f32."""
    B, C_in, N, T = x.shape
    n_comp = w1.shape[0]
    c_out = w2.shape[1]
    x2 = jnp.transpose(x, (0, 2, 3, 1)).reshape(-1, C_in)
    acc = jnp.zeros((x2.shape[0], c_out), jnp.float32)
    for k in range(n_comp):
        h = jnp.maximum(x2 @ w1[k] + b1[k], 0.0)
        acc = acc + h @ w2 + b2
    out = acc * scale.reshape(()) + mean.reshape(())
    return out.reshape(B, N, T, c_out).transpose(0, 3, 1, 2)


if __name__ == "__main__":
    def make_inputs(key, B, C_in, N, T, c_hid, c_out, n_comp):
        ks = jax.random.split(key, 5)
        x = jax.random.normal(ks[0], (B, C_in, N, T), jnp.float32)
        w1 = jax.random.normal(ks[1], (n_comp, C_in, c_hid), jnp.float32) * 0.1
        b1 = jax.random.normal(ks[2], (n_comp, 1, c_hid), jnp.float32) * 0.1
        w2 = jax.random.normal(ks[3], (c_hid, c_out), jnp.float32) * 0.1
        b2 = jax.random.normal(ks[4], (1, c_out), jnp.float32) * 0.1
        return x, w1, b1, w2, b2

    scale = jnp.array([[2.5]], jnp.float32)   # Scaler std
    mean = jnp.array([[0.7]], jnp.float32)    # Scaler mean
    # bf16 MXU path -> ~1e-2-level error vs the all-f32 reference
    ATOL = RTOL = 5e-2

    # ---- main test: small shapes consistent with the module config ----------
    B, C_in, N, T = 2, 4, 16, 8          # batch, c_in, num_nodes, seq_len
    c_hid, c_out = 32, 2                 # config.c_hid, config.c_out
    p, q = 2, 2                          # decomposition factors -> p*q components
    n_comp = p * q

    x, w1, b1, w2, b2 = make_inputs(jax.random.PRNGKey(0), B, C_in, N, T,
                                    c_hid, c_out, n_comp)
    out = stgdl_forward(x, w1, b1, w2, b2, scale, mean)
    jax.block_until_ready(out)
    ref = stgdl_reference(x, w1, b1, w2, b2, scale, mean)
    assert out.shape == (B, c_out, N, T)
    assert jnp.allclose(out, ref, atol=ATOL, rtol=RTOL), \
        float(jnp.max(jnp.abs(out - ref)))

    # ---- NT not a multiple of 128 + in-kernel tail chunk (no padding) -------
    B2, N2, T2 = 3, 25, 12               # NT = 300
    x2_, w1_, b1_, w2_, b2_ = make_inputs(jax.random.PRNGKey(1), B2, C_in, N2, T2,
                                          c_hid, c_out, n_comp)
    out2 = stgdl_forward(x2_, w1_, b1_, w2_, b2_, scale, mean, chunk_lanes=128)
    jax.block_until_ready(out2)
    ref2 = stgdl_reference(x2_, w1_, b1_, w2_, b2_, scale, mean)
    assert jnp.allclose(out2, ref2, atol=ATOL, rtol=RTOL), \
        float(jnp.max(jnp.abs(out2 - ref2)))

    # ---- lane tiling with a partial last block (no jnp.pad / output slice) --
    out3 = stgdl_forward(x2_, w1_, b1_, w2_, b2_, scale, mean,
                         target_lanes=256, chunk_lanes=128)
    jax.block_until_ready(out3)
    assert jnp.allclose(out3, ref2, atol=ATOL, rtol=RTOL), \
        float(jnp.max(jnp.abs(out3 - ref2)))

    print("KERNEL_OK")
</pallas_src>

<mosaic_0001>
module attributes {stable_mosaic.version = 11 : i64} {
  func.func @stgdl_kernel(%arg0: i32, %arg1: i32, %arg2: memref<2x4x128xf32, #tpu.memory_space<vmem>>, %arg3: memref<128x4xbf16, #tpu.memory_space<vmem>>, %arg4: memref<128x1xf32, #tpu.memory_space<vmem>>, %arg5: memref<2x128xbf16, #tpu.memory_space<vmem>>, %arg6: memref<2x1xf32, #tpu.memory_space<vmem>>, %arg7: memref<2x2x128xf32, #tpu.memory_space<vmem>>, %arg8: memref<128x128xbf16, #tpu.memory_space<vmem>>) attributes {dimension_semantics = [#tpu.dimension_semantics<parallel>, #tpu.dimension_semantics<parallel>], iteration_bounds = array<i64: 1, 1>, scalar_prefetch = 0 : i64, scratch_operands = 1 : i64, tpu.core_type = #tpu.core_type<tc>, window_params = [{transform_indices = @transform_0, window_bounds = array<i64: 2, 4, 128>}, {pipeline_mode = #tpu.pipeline_mode<synchronous>, transform_indices = @transform_1, window_bounds = array<i64: 128, 4>}, {pipeline_mode = #tpu.pipeline_mode<synchronous>, transform_indices = @transform_2, window_bounds = array<i64: 128, 1>}, {pipeline_mode = #tpu.pipeline_mode<synchronous>, transform_indices = @transform_3, window_bounds = array<i64: 2, 128>}, {pipeline_mode = #tpu.pipeline_mode<synchronous>, transform_indices = @transform_4, window_bounds = array<i64: 2, 1>}, {transform_indices = @transform_5, window_bounds = array<i64: 2, 2, 128>}]} {
    %c0 = arith.constant 0 : index
    %c0_0 = arith.constant 0 : index
    %0 = vector.load %arg3[%c0, %c0_0] : memref<128x4xbf16, #tpu.memory_space<vmem>>, vector<128x4xbf16>
    %c0_1 = arith.constant 0 : index
    %c0_2 = arith.constant 0 : index
    %1 = vector.load %arg5[%c0_1, %c0_2] : memref<2x128xbf16, #tpu.memory_space<vmem>>, vector<2x128xbf16>
    %c0_3 = arith.constant 0 : index
    %c0_4 = arith.constant 0 : index
    %2 = vector.load %arg4[%c0_3, %c0_4] : memref<128x1xf32, #tpu.memory_space<vmem>>, vector<128x1xf32>
    %3 = vector.shape_cast %2 : vector<128x1xf32> to vector<128x1xf32>
    %4 = vector.broadcast %3 : vector<128x1xf32> to vector<128x128xf32>
    %c0_5 = arith.constant 0 : index
    %c0_6 = arith.constant 0 : index
    %5 = vector.load %arg6[%c0_5, %c0_6] : memref<2x1xf32, #tpu.memory_space<vmem>>, vector<2x1xf32>
    %6 = vector.shape_cast %5 : vector<2x1xf32> to vector<2x1xf32>
    %7 = vector.broadcast %6 : vector<2x1xf32> to vector<2x128xf32>
    %c0_i32 = arith.constant 0 : i32
    %c2_i32 = arith.constant 2 : i32
    %8 = arith.addi %c0_i32, %c2_i32 : i32
    %c1_i32 = arith.constant 1 : i32
    scf.for %arg9 = %c0_i32 to %8 step %c1_i32  : i32 {
      %c0_i32_8 = arith.constant 0 : i32
      %c128_i32 = arith.constant 128 : i32
      %9 = arith.muli %c0_i32_8, %c128_i32 : i32
      %10 = tpu.assume_multiple %9, 128 : i32
      %11 = arith.index_cast %arg9 : i32 to index
      %c0_9 = arith.constant 0 : index
      %12 = arith.index_cast %10 : i32 to index
      %13 = vector.load %arg2[%11, %c0_9, %12] : memref<2x4x128xf32, #tpu.memory_space<vmem>>, vector<1x4x128xf32>
      %14 = vector.shape_cast %13 : vector<1x4x128xf32> to vector<4x128xf32>
      %15 = arith.truncf %14 : vector<4x128xf32> to vector<4x128xbf16>
      %cst = arith.constant dense<0.000000e+00> : vector<128x128xf32>
      %16 = tpu.matmul %0, %15, %cst {dimension_numbers = #tpu.dot_dimension_numbers<[1], [0], [0], [1], [0, 0, 1, 1], [], []>} : vector<128x4xbf16>, vector<4x128xbf16>, vector<128x128xf32> -> vector<128x128xf32>
      %17 = arith.addf %16, %4 : vector<128x128xf32>
      %cst_10 = arith.constant 0.000000e+00 : f32
      %18 = vector.broadcast %cst_10 : f32 to vector<128x128xf32>
      %19 = arith.maximumf %17, %18 : vector<128x128xf32>
      %20 = arith.truncf %19 : vector<128x128xf32> to vector<128x128xbf16>
      %c0_11 = arith.constant 0 : index
      %c0_12 = arith.constant 0 : index
      %21 = vector.load %arg8[%c0_11, %c0_12] : memref<128x128xbf16, #tpu.memory_space<vmem>>, vector<128x128xbf16>
      tpu.vector_store %arg8[%c0_11, %c0_12], %20 {strides = array<i32>} : memref<128x128xbf16, #tpu.memory_space<vmem>>, vector<128x128xbf16>,
      %c0_13 = arith.constant 0 : index
      %c0_14 = arith.constant 0 : index
      %22 = vector.load %arg8[%c0_13, %c0_14] : memref<128x128xbf16, #tpu.memory_space<vmem>>, vector<128x128xbf16>
      %cst_15 = arith.constant dense<0.000000e+00> : vector<2x128xf32>
      %23 = tpu.matmul %1, %22, %cst_15 {dimension_numbers = #tpu.dot_dimension_numbers<[1], [0], [0], [1], [0, 0, 1, 1], [], []>} : vector<2x128xbf16>, vector<128x128xbf16>, vector<2x128xf32> -> vector<2x128xf32>
      %24 = arith.addf %23, %7 : vector<2x128xf32>
      %25 = arith.index_cast %arg9 : i32 to index
      %c0_16 = arith.constant 0 : index
      %26 = arith.index_cast %10 : i32 to index
      %27 = vector.load %arg7[%25, %c0_16, %26] : memref<2x2x128xf32, #tpu.memory_space<vmem>>, vector<1x2x128xf32>
      %28 = vector.shape_cast %27 : vector<1x2x128xf32> to vector<2x128xf32>
      %29 = vector.shape_cast %24 : vector<2x128xf32> to vector<1x2x128xf32>
      tpu.vector_store %arg7[%25, %c0_16, %26], %29 {strides = array<i32>} : memref<2x2x128xf32, #tpu.memory_space<vmem>>, vector<1x2x128xf32>,
      %c1_i32_17 = arith.constant 1 : i32
    }
    %c2_i32_7 = arith.constant 2 : i32
    return
  }
  func.func @transform_0(%arg0: i32, %arg1: i32) -> (i32, i32, i32) {
    %c0_i32 = arith.constant 0 : i32
    %c0_i32_0 = arith.constant 0 : i32
    return %arg0, %c0_i32, %arg1 : i32, i32, i32
  }
  func.func @transform_1(%arg0: i32, %arg1: i32) -> (i32, i32) {
    %c0_i32 = arith.constant 0 : i32
    %c0_i32_0 = arith.constant 0 : i32
    %c0_i32_1 = arith.constant 0 : i32
    return %c0_i32, %c0_i32_0 : i32, i32
  }
  func.func @transform_2(%arg0: i32, %arg1: i32) -> (i32, i32) {
    %c0_i32 = arith.constant 0 : i32
    %c0_i32_0 = arith.constant 0 : i32
    %c0_i32_1 = arith.constant 0 : i32
    return %c0_i32, %c0_i32_0 : i32, i32
  }
  func.func @transform_3(%arg0: i32, %arg1: i32) -> (i32, i32) {
    %c0_i32 = arith.constant 0 : i32
    %c0_i32_0 = arith.constant 0 : i32
    %c0_i32_1 = arith.constant 0 : i32
    return %c0_i32, %c0_i32_0 : i32, i32
  }
  func.func @transform_4(%arg0: i32, %arg1: i32) -> (i32, i32) {
    %c0_i32 = arith.constant 0 : i32
    %c0_i32_0 = arith.constant 0 : i32
    %c0_i32_1 = arith.constant 0 : i32
    return %c0_i32, %c0_i32_0 : i32, i32
  }
  func.func @transform_5(%arg0: i32, %arg1: i32) -> (i32, i32, i32) {
    %c0_i32 = arith.constant 0 : i32
    %c0_i32_0 = arith.constant 0 : i32
    return %arg0, %c0_i32, %arg1 : i32, i32, i32
  }
}

</mosaic_0001>

<llo_original>
// kernel: tpu_custom_call.1
$region0: #{tpu_custom_call.1}
  #allocation0 [shape = 'u32[]', space=smem, size = 0x4, offset = 0x4, fixed_abs, tag = 'smem constant byte address 0x4 - core index']
  #allocation1 [shape = 'u32[144,128]{1,0:T(1,128)}', space=vmem, size = 0x12000, scoped, tag = 'internal scratch']
  #allocation2 [shape = 'bf16[128,128]{1,0:T(16,128)(2,1)}', space=vmem, size = 0x8000, scoped, tag = 'scratch operand']
  %s0 = inlined_call_operand.vmem [shape: f32[2,4,128], index: 0, kind: input, shape index: {}]
  %s1 = inlined_call_operand.vmem [shape: bf16[128,4], index: 1, kind: input, shape index: {}]
  %s2 = inlined_call_operand.vmem [shape: f32[128,1], index: 2, kind: input, shape index: {}]
  %s3 = inlined_call_operand.vmem [shape: bf16[2,128], index: 3, kind: input, shape index: {}]
  %s4 = inlined_call_operand.vmem [shape: f32[2,1], index: 4, kind: input, shape index: {}]
  %s5 = inlined_call_operand.hbm [shape: f32[2,2,128], index: 5, kind: output, shape index: {}]
  %s6 = sld [smem:[#allocation0]]
  $region37: #{tpu_custom_call.1} parent=0
    _
  %s8 = ssub.s32 1, %s6
  %s9 = scalar_select 0, %s8, %s6
  $region1: #{tpu_custom_call.1} parent=0
    #allocation3 [shape = 'u8[2048]{0}', space=vmem, size = 0x800, scoped, tag = 'output window, operand 0, single buffered']
    #allocation4 [shape = 's32[1]{0}', space=sflag, size = 0x4, scoped, tag = 'scoped memory for tpu_custom_call.1']
    %10 = vsyncpa [#allocation4], 0
    // Predicated region
    $region2: #{tpu_custom_call.1} parent=1 // pred_check
      _
    $region3: #{tpu_custom_call.1} parent=1 // pred_check_branch
      %12 = sbr.rel (0) target = $region5
    $region4: #{tpu_custom_call.1} parent=1 // pred_region
      _
    $region5: #{tpu_custom_call.1} parent=1 // pred_fallthru
      _
    // Predicated region
    $region6: #{tpu_custom_call.1} parent=1 // pred_check
      _
    $region7: #{tpu_custom_call.1} parent=1 // pred_check_branch
      %14 = sbr.rel (0) target = $region9
    $region8: #{tpu_custom_call.1} parent=1 // pred_region
      _
    $region9: #{tpu_custom_call.1} parent=1 // pred_fallthru
      _
    // Predicated region
    $region10: #{tpu_custom_call.1} parent=1 // pred_check
      _
    $region11: #{tpu_custom_call.1} parent=1 // pred_check_branch
      %16 = sbr.rel (0) target = $region13
    $region12: #{tpu_custom_call.1} parent=1 // pred_region
      _
    $region13: #{tpu_custom_call.1} parent=1 // pred_fallthru
      _
    // Predicated region
    $region14: #{tpu_custom_call.1} parent=1 // pred_check
      _
    $region15: #{tpu_custom_call.1} parent=1 // pred_check_branch
      %18 = sbr.rel (0) target = $region17
    $region16: #{tpu_custom_call.1} parent=1 // pred_region
      _
    $region17: #{tpu_custom_call.1} parent=1 // pred_fallthru
      _
    // Predicated region
    $region18: #{tpu_custom_call.1} parent=1 // pred_check
      _
    $region19: #{tpu_custom_call.1} parent=1 // pred_check_branch
      %20 = sbr.rel (0) target = $region21
    $region20: #{tpu_custom_call.1} parent=1 // pred_region
      _
    $region21: #{tpu_custom_call.1} parent=1 // pred_fallthru
      _
    %v22 = vld [vmem:[%s1] sm:$0xf]
    %v23 = vld [vmem:[%s1 + $0x4] sm:$0xf]
    %v24 = vld [vmem:[%s1 + $0x8] sm:$0xf]
    %v25 = vld [vmem:[%s1 + $0xc] sm:$0xf]
    %v26 = vld [vmem:[%s1 + $0x10] sm:$0xf]
    %v27 = vld [vmem:[%s1 + $0x14] sm:$0xf]
    %v28 = vld [vmem:[%s1 + $0x18] sm:$0xf]
    %v29 = vld [vmem:[%s1 + $0x1c] sm:$0xf]
    %v30 = vld [vmem:[%s1 + $0x20] sm:$0xf]
    %v31 = vld [vmem:[%s1 + $0x24] sm:$0xf]
    %v32 = vld [vmem:[%s1 + $0x28] sm:$0xf]
    %v33 = vld [vmem:[%s1 + $0x2c] sm:$0xf]
    %v34 = vld [vmem:[%s1 + $0x30] sm:$0xf]
    %v35 = vld [vmem:[%s1 + $0x34] sm:$0xf]
    %v36 = vld [vmem:[%s1 + $0x38] sm:$0xf]
    %v37 = vld [vmem:[%s1 + $0x3c] sm:$0xf]
    %v38 = vld [vmem:[%s3] sm:$0x1]
    %v39 = vld [vmem:[%s2] sm:$0xff]
    %v40 = vld [vmem:[%s2 + $0x8] sm:$0xff]
    %v41 = vld [vmem:[%s2 + $0x10] sm:$0xff]
    %v42 = vld [vmem:[%s2 + $0x18] sm:$0xff]
    %v43 = vld [vmem:[%s2 + $0x20] sm:$0xff]
    %v44 = vld [vmem:[%s2 + $0x28] sm:$0xff]
    %v45 = vld [vmem:[%s2 + $0x30] sm:$0xff]
    %v46 = vld [vmem:[%s2 + $0x38] sm:$0xff]
    %v47 = vld [vmem:[%s2 + $0x40] sm:$0xff]
    %v48 = vld [vmem:[%s2 + $0x48] sm:$0xff]
    %v49 = vld [vmem:[%s2 + $0x50] sm:$0xff]
    %v50 = vld [vmem:[%s2 + $0x58] sm:$0xff]
    %v51 = vld [vmem:[%s2 + $0x60] sm:$0xff]
    %v52 = vld [vmem:[%s2 + $0x68] sm:$0xff]
    %v53 = vld [vmem:[%s2 + $0x70] sm:$0xff]
    %v54 = vld [vmem:[%s2 + $0x78] sm:$0xff]
    %56 = vset.pattern.permute.xlu0 0
    %57 = vperm.xlu0 %56, %v39
    %v58 = vpop.permute.xlu0 %57
    %61 = vset.pattern.permute.xlu0 0
    %62 = vperm.xlu0 %61, %v40
    %v63 = vpop.permute.xlu0 %62
    %66 = vset.pattern.permute.xlu0 0
    %67 = vperm.xlu0 %66, %v41
    %v68 = vpop.permute.xlu0 %67
    %71 = vset.pattern.permute.xlu0 0
    %72 = vperm.xlu0 %71, %v42
    %v73 = vpop.permute.xlu0 %72
    %76 = vset.pattern.permute.xlu0 0
    %77 = vperm.xlu0 %76, %v43
    %v78 = vpop.permute.xlu0 %77
    %81 = vset.pattern.permute.xlu0 0
    %82 = vperm.xlu0 %81, %v44
    %v83 = vpop.permute.xlu0 %82
    %86 = vset.pattern.permute.xlu0 0
    %87 = vperm.xlu0 %86, %v45
    %v88 = vpop.permute.xlu0 %87
    %91 = vset.pattern.permute.xlu0 0
    %92 = vperm.xlu0 %91, %v46
    %v93 = vpop.permute.xlu0 %92
    %96 = vset.pattern.permute.xlu0 0
    %97 = vperm.xlu0 %96, %v47
    %v98 = vpop.permute.xlu0 %97
    %101 = vset.pattern.permute.xlu0 0
    %102 = vperm.xlu0 %101, %v48
    %v103 = vpop.permute.xlu0 %102
    %106 = vset.pattern.permute.xlu0 0
    %107 = vperm.xlu0 %106, %v49
    %v108 = vpop.permute.xlu0 %107
    %111 = vset.pattern.permute.xlu0 0
    %112 = vperm.xlu0 %111, %v50
    %v113 = vpop.permute.xlu0 %112
    %116 = vset.pattern.permute.xlu0 0
    %117 = vperm.xlu0 %116, %v51
    %v118 = vpop.permute.xlu0 %117
    %121 = vset.pattern.permute.xlu0 0
    %122 = vperm.xlu0 %121, %v52
    %v123 = vpop.permute.xlu0 %122
    %126 = vset.pattern.permute.xlu0 0
    %127 = vperm.xlu0 %126, %v53
    %v128 = vpop.permute.xlu0 %127
    %131 = vset.pattern.permute.xlu0 0
    %132 = vperm.xlu0 %131, %v54
    %v133 = vpop.permute.xlu0 %132
    %v135 = vld [vmem:[%s4] sm:$0x3]
    %137 = vset.pattern.permute.xlu0 0
    %138 = vperm.xlu0 %137, %v135
    %v139 = vpop.permute.xlu0 %138
    loop: start=0, step=1, limit=2
    $region22: #{tpu_custom_call.1} parent=1 // loop_pre_header
      _
    $region23: #{tpu_custom_call.1} parent=1 // loop_header
      %s142 = sphi 0, %s146
      %p143 = scmp.ge.s32.totalorder %s142, 2
    $region24: #{tpu_custom_call.1} parent=1 // loop_header_branch
      %145 = sbr.rel (%p143) target = $region28
    $region25: #{tpu_custom_call.1} parent=1 // loop_body
      %s147 = smul.u32 %s142, 4
      %s148 = sadd.s32 0, %s147
      %s149 = scalar_lea.vmem %s0, %s148
      %v150 = vld [vmem:[%s149] sm:$0xf]
      %v151 = vpack.c.bf16 %v150, %v150
      %v168 = vunpack.c.l.b16 %v22
      %v169 = vunpack.c.l.b16 %v23
      %v170 = vunpack.c.l.b16 %v24
      %v171 = vunpack.c.l.b16 %v25
      %v172 = vunpack.c.l.b16 %v26
      %v173 = vunpack.c.l.b16 %v27
      %v174 = vunpack.c.l.b16 %v28
      %v175 = vunpack.c.l.b16 %v29
      %v176 = vunpack.c.l.b16 %v30
      %v177 = vunpack.c.l.b16 %v31
      %v178 = vunpack.c.l.b16 %v32
      %v179 = vunpack.c.l.b16 %v33
      %v180 = vunpack.c.l.b16 %v34
      %v181 = vunpack.c.l.b16 %v35
      %v182 = vunpack.c.l.b16 %v36
      %v183 = vunpack.c.l.b16 %v37
      %v184 = vpack.c.b16 %v169, %v168
      %v185 = vpack.c.b16 %v171, %v170
      %v186 = vpack.c.b16 %v173, %v172
      %v187 = vpack.c.b16 %v175, %v174
      %v188 = vpack.c.b16 %v177, %v176
      %v189 = vpack.c.b16 %v179, %v178
      %v190 = vpack.c.b16 %v181, %v180
      %v191 = vpack.c.b16 %v183, %v182
      %vm192 = vcmask 31744
      %v194 = vsel %vm192, %v184, 0
      %v197 = vsel %vm192, %v185, 0
      %v200 = vsel %vm192, %v186, 0
      %v203 = vsel %vm192, %v187, 0
      %v206 = vsel %vm192, %v188, 0
      %v209 = vsel %vm192, %v189, 0
      %v212 = vsel %vm192, %v190, 0
      %v215 = vsel %vm192, %v191, 0
      %vm217 = vcmask 1041408
      %v219 = vsel %vm217, %v151, 0
      %221 = vmatprep.subr.bf16.mxu0 0
      %222 = vmatpush1.bf16.msra.mxu0 %v219
      %223 = vmatprep.subr.bf16.mxu0 0
      %224 = vmatpush1.bf16.msra.mxu0 0
      %225 = vmatprep.subr.bf16.mxu0 0
      %226 = vmatpush1.bf16.msra.mxu0 0
      %227 = vmatprep.subr.bf16.mxu0 0
      %228 = vmatpush1.bf16.msra.mxu0 0
      %229 = vmatprep.subr.bf16.mxu0 0
      %230 = vmatpush1.bf16.msra.mxu0 0
      %231 = vmatprep.subr.bf16.mxu0 0
      %232 = vmatpush1.bf16.msra.mxu0 0
      %233 = vmatprep.subr.bf16.mxu0 0
      %234 = vmatpush1.bf16.msra.mxu0 0
      %235 = vmatprep.subr.bf16.mxu0 0
      %236 = vmatpush1.bf16.msra.mxu0 0
      %237 = vmatprep.subr.bf16.mxu0 0
      %238 = vmatpush1.bf16.msra.mxu0 0
      %239 = vmatprep.subr.bf16.mxu0 0
      %240 = vmatpush1.bf16.msra.mxu0 0
      %241 = vmatprep.subr.bf16.mxu0 0
      %242 = vmatpush1.bf16.msra.mxu0 0
      %243 = vmatprep.subr.bf16.mxu0 0
      %244 = vmatpush1.bf16.msra.mxu0 0
      %245 = vmatprep.subr.bf16.mxu0 0
      %246 = vmatpush1.bf16.msra.mxu0 0
      %247 = vmatprep.subr.bf16.mxu0 0
      %248 = vmatpush1.bf16.msra.mxu0 0
      %249 = vmatprep.subr.bf16.mxu0 0
      %250 = vmatpush1.bf16.msra.mxu0 0
      %251 = vmatprep.subr.bf16.mxu0 0
      %252 = vmatpush1.bf16.msra.mxu0 0
      %253 = vmatprep.mubr.bf16.mxu0 0
      %254 = vmatmul.mubr.bf16.gmra.mrb[0].mxu0 %v194
      %v255 = vpop.f32.mrb[0].mxu0
      %v256 = vadd.f32 %v58, %v255
      %v257 = vpop.f32.mrb[0].mxu0
      %v258 = vpop.f32.mrb[0].mxu0
      %v259 = vadd.f32 %v63, %v258
      %v260 = vpop.f32.mrb[0].mxu0
      %261 = vmatprep.mubr.bf16.mxu0 0
      %262 = vmatmul.mubr.bf16.gmra.mrb[0].mxu0 %v197
      %v263 = vpop.f32.mrb[0].mxu0
      %v264 = vadd.f32 %v68, %v263
      %v265 = vpop.f32.mrb[0].mxu0
      %v266 = vpop.f32.mrb[0].mxu0
      %v267 = vadd.f32 %v73, %v266
      %v268 = vpop.f32.mrb[0].mxu0
      %269 = vmatprep.mubr.bf16.mxu0 0
      %270 = vmatmul.mubr.bf16.gmra.mrb[0].mxu0 %v200
      %v271 = vpop.f32.mrb[0].mxu0
      %v272 = vadd.f32 %v78, %v271
      %v273 = vpop.f32.mrb[0].mxu0
      %v274 = vpop.f32.mrb[0].mxu0
      %v275 = vadd.f32 %v83, %v274
      %v276 = vpop.f32.mrb[0].mxu0
      %277 = vmatprep.mubr.bf16.mxu0 0
      %278 = vmatmul.mubr.bf16.gmra.mrb[0].mxu0 %v203
      %v279 = vpop.f32.mrb[0].mxu0
      %v280 = vadd.f32 %v88, %v279
      %v281 = vpop.f32.mrb[0].mxu0
      %v282 = vpop.f32.mrb[0].mxu0
      %v283 = vadd.f32 %v93, %v282
      %v284 = vpop.f32.mrb[0].mxu0
      %285 = vmatprep.mubr.bf16.mxu0 0
      %286 = vmatmul.mubr.bf16.gmra.mrb[0].mxu0 %v206
      %v287 = vpop.f32.mrb[0].mxu0
      %v288 = vadd.f32 %v98, %v287
      %v289 = vpop.f32.mrb[0].mxu0
      %v290 = vpop.f32.mrb[0].mxu0
      %v291 = vadd.f32 %v103, %v290
      %v292 = vpop.f32.mrb[0].mxu0
      %293 = vmatprep.mubr.bf16.mxu0 0
      %294 = vmatmul.mubr.bf16.gmra.mrb[0].mxu0 %v209
      %v295 = vpop.f32.mrb[0].mxu0
      %v296 = vadd.f32 %v108, %v295
      %v297 = vpop.f32.mrb[0].mxu0
      %v298 = vpop.f32.mrb[0].mxu0
      %v299 = vadd.f32 %v113, %v298
      %v300 = vpop.f32.mrb[0].mxu0
      %301 = vmatprep.mubr.bf16.mxu0 0
      %302 = vmatmul.mubr.bf16.gmra.mrb[0].mxu0 %v212
      %v303 = vpop.f32.mrb[0].mxu0
      %v304 = vadd.f32 %v118, %v303
      %v305 = vpop.f32.mrb[0].mxu0
      %v306 = vpop.f32.mrb[0].mxu0
      %v307 = vadd.f32 %v123, %v306
      %v308 = vpop.f32.mrb[0].mxu0
      %309 = vmatprep.mubr.bf16.mxu0 0
      %310 = vmatmul.mubr.bf16.gmra.mrb[0].mxu0 %v215
      %v311 = vpop.f32.mrb[0].mxu0
      %v312 = vadd.f32 %v128, %v311
      %v313 = vpop.f32.mrb[0].mxu0
      %v314 = vpop.f32.mrb[0].mxu0
      %v315 = vadd.f32 %v133, %v314
      %v316 = vpop.f32.mrb[0].mxu0
      %317 = vdwg.mxu0
      %v318 = vmax.f32 %v256, 0.0
      %v319 = vmax.f32 %v259, 0.0
      %v320 = vmax.f32 %v264, 0.0
      %v321 = vmax.f32 %v267, 0.0
      %v322 = vmax.f32 %v272, 0.0
      %v323 = vmax.f32 %v275, 0.0
      %v324 = vmax.f32 %v280, 0.0
      %v325 = vmax.f32 %v283, 0.0
      %v326 = vmax.f32 %v288, 0.0
      %v327 = vmax.f32 %v291, 0.0
      %v328 = vmax.f32 %v296, 0.0
      %v329 = vmax.f32 %v299, 0.0
      %v330 = vmax.f32 %v304, 0.0
      %v331 = vmax.f32 %v307, 0.0
      %v332 = vmax.f32 %v312, 0.0
      %v333 = vmax.f32 %v315, 0.0
      %v334 = vpack.c.bf16 %v319, %v318
      %v335 = vpack.c.bf16 %v321, %v320
      %v336 = vpack.c.bf16 %v323, %v322
      %v337 = vpack.c.bf16 %v325, %v324
      %v338 = vpack.c.bf16 %v327, %v326
      %v339 = vpack.c.bf16 %v329, %v328
      %v340 = vpack.c.bf16 %v331, %v330
      %v341 = vpack.c.bf16 %v333, %v332
      %342 = vst [vmem:[#allocation2] sm:$0xff] %v334
      %343 = vst [vmem:[#allocation2 + $0x8] sm:$0xff] %v335
      %344 = vst [vmem:[#allocation2 + $0x10] sm:$0xff] %v336
      %345 = vst [vmem:[#allocation2 + $0x18] sm:$0xff] %v337
      %346 = vst [vmem:[#allocation2 + $0x20] sm:$0xff] %v338
      %347 = vst [vmem:[#allocation2 + $0x28] sm:$0xff] %v339
      %348 = vst [vmem:[#allocation2 + $0x30] sm:$0xff] %v340
      %349 = vst [vmem:[#allocation2 + $0x38] sm:$0xff] %v341
      %v350 = vld [vmem:[#allocation2] sm:$0xff]
      %v351 = vld [vmem:[#allocation2 + $0x8] sm:$0xff]
      %v352 = vld [vmem:[#allocation2 + $0x10] sm:$0xff]
      %v353 = vld [vmem:[#allocation2 + $0x18] sm:$0xff]
      %v354 = vld [vmem:[#allocation2 + $0x20] sm:$0xff]
      %v355 = vld [vmem:[#allocation2 + $0x28] sm:$0xff]
      %v356 = vld [vmem:[#allocation2 + $0x30] sm:$0xff]
      %v357 = vld [vmem:[#allocation2 + $0x38] sm:$0xff]
      %358 = vmatprep.subr.bf16.mxu0 0
      %359 = vmatpush1.bf16.msra.mxu0 %v350
      %360 = vmatprep.subr.bf16.mxu0 0
      %361 = vmatpush1.bf16.msra.mxu0 %v351
      %362 = vmatprep.subr.bf16.mxu0 0
      %363 = vmatpush1.bf16.msra.mxu0 %v352
      %364 = vmatprep.subr.bf16.mxu0 0
      %365 = vmatpush1.bf16.msra.mxu0 %v353
      %366 = vmatprep.subr.bf16.mxu0 0
      %367 = vmatpush1.bf16.msra.mxu0 %v354
      %368 = vmatprep.subr.bf16.mxu0 0
      %369 = vmatpush1.bf16.msra.mxu0 %v355
      %370 = vmatprep.subr.bf16.mxu0 0
      %371 = vmatpush1.bf16.msra.mxu0 %v356
      %372 = vmatprep.subr.bf16.mxu0 0
      %373 = vmatpush1.bf16.msra.mxu0 %v357
      %374 = vmatprep.subr.bf16.mxu0 0
      %375 = vmatpush1.bf16.msra.mxu0 0
      %376 = vmatprep.subr.bf16.mxu0 0
      %377 = vmatpush1.bf16.msra.mxu0 0
      %378 = vmatprep.subr.bf16.mxu0 0
      %379 = vmatpush1.bf16.msra.mxu0 0
      %380 = vmatprep.subr.bf16.mxu0 0
      %381 = vmatpush1.bf16.msra.mxu0 0
      %382 = vmatprep.subr.bf16.mxu0 0
      %383 = vmatpush1.bf16.msra.mxu0 0
      %384 = vmatprep.subr.bf16.mxu0 0
      %385 = vmatpush1.bf16.msra.mxu0 0
      %386 = vmatprep.subr.bf16.mxu0 0
      %387 = vmatpush1.bf16.msra.mxu0 0
      %388 = vmatprep.subr.bf16.mxu0 0
      %389 = vmatpush1.bf16.msra.mxu0 0
      %390 = vmatprep.mubr.bf16.mxu0 0
      %391 = vmatmul.mubr.bf16.gmra.mrb[0].mxu0 %v38
      %v392 = vpop.f32.mrb[0].mxu0
      %v393 = vadd.f32 %v139, %v392
      %v394 = vpop.f32.mrb[0].mxu0
      %v395 = vpop.f32.mrb[0].mxu0
      %v396 = vpop.f32.mrb[0].mxu0
      %397 = vdwg.mxu0
      %s398 = smul.u32 %s142, 2
      %s399 = sadd.s32 0, %s398
      %s400 = scalar_lea.vmem [#allocation3], %s399
      %401 = vst [vmem:[%s400] sm:$0x3] %v393
    $region26: #{tpu_custom_call.1} parent=1 // loop_footer
      %s146 = sadd.s32 1, %s142
    $region27: #{tpu_custom_call.1} parent=1 // loop_footer_branch
      %141 = sbr.rel target = $region23
    $region28: #{tpu_custom_call.1} parent=1 // loop_exit
      _
    // Predicated region
    $region29: #{tpu_custom_call.1} parent=1 // pred_check
      _
    $region30: #{tpu_custom_call.1} parent=1 // pred_check_branch
      %403 = sbr.rel (0) target = $region32
    $region31: #{tpu_custom_call.1} parent=1 // pred_region
      %s405 = ssub.s32 64, 64
      %406 = vsyncadd [#allocation4], %s405
      %s407 = sshll.u32 [#allocation3], 4
      %s408 = int_to_ptr.vmem [resolvable:$true] %s407
      %413 = dma.vmem_to_hbm [thread:$0]  %s408, 64, %s5, [#allocation4], 32, 32, 2
    $region32: #{tpu_custom_call.1} parent=1 // pred_fallthru
      _
    // Predicated region
    $region33: #{tpu_custom_call.1} parent=1 // pred_check
      _
    $region34: #{tpu_custom_call.1} parent=1 // pred_check_branch
      %415 = sbr.rel (0) target = $region36
    $region35: #{tpu_custom_call.1} parent=1 // pred_region
      %416 = dma.done [#allocation4], 64
    $region36: #{tpu_custom_call.1} parent=1 // pred_fallthru
      _
    %417 = vsyncpa [#allocation4], 1

</llo_original>
